<compile_context>
chip_gen: v5e
topology: v5e:2x2
jax: 0.10.0
libtpu: 0.0.40
codegen_flags: <defaults>
</compile_context>

<pallas_src>
import functools

import jax
import jax.numpy as jnp
from jax.experimental import pallas as pl
from jax.experimental.pallas import tpu as pltpu

LAMBDA_ADV = 1.0
LAMBDA_CAM = 10.0
LAMBDA_RECON = 10.0

_TILE_BYTES_BUDGET = 2 * 1024 * 1024   # per pipelined input block (v7x-safe)
_TILE_LANE_MAX = 8 * 1024              # cap on lane width of a spatial tile


def _round_up(x, m):
    return -(-x // m) * m


def _plan_spatial_tiling(n, c, s, itemsize, max_tile_lanes):
    """Pick (tile_s, s_pad, num_tiles) for the spatial (lane) axis."""
    s_up = _round_up(s, 128)
    cap = max(128, (_TILE_BYTES_BUDGET // max(1, n * c * itemsize)) // 128 * 128)
    cap = min(cap, max(128, (max_tile_lanes // 128) * 128))
    num_tiles = max(1, -(-s_up // cap))
    tile_s = _round_up(-(-s // num_tiles), 128)
    s_pad = num_tiles * tile_s
    return tile_s, s_pad, num_tiles


def _cam_guided_loss_kernel(pred_ref, refined_ref, target_ref, cam_ref,
                            out_ref, diff_acc, cam_acc, adv_acc,
                            *, inv_img_count, inv_pred_count):
    step = pl.program_id(0)
    last = pl.num_programs(0) - 1

    @pl.when(step == 0)
    def _init():
        diff_acc[...] = jnp.zeros_like(diff_acc)
        cam_acc[...] = jnp.zeros_like(cam_acc)
        # adv term: fake_pred is tiny and VMEM-resident (constant index_map),
        # so reduce it exactly once; padded entries are 1.0 -> contribute 0.
        pred = pred_ref[...].astype(jnp.float32)
        adv_acc[0] = jnp.sum((pred - 1.0) ** 2)

    # |refined - target| for this spatial tile, accumulated in f32.
    diff = jnp.abs(refined_ref[...].astype(jnp.float32)
                   - target_ref[...].astype(jnp.float32))        # (N, C, T)
    diff_c = jnp.sum(diff, axis=1)                               # (N, T): sum over channels
    diff_acc[...] += diff_c
    # cam broadcasts over channels: sum_c cam*|d| == cam * sum_c |d|.
    cam_acc[...] += cam_ref[...].astype(jnp.float32) * diff_c

    @pl.when(step == last)
    def _finalize():
        recon = jnp.sum(diff_acc[...]) * inv_img_count
        cam_l = jnp.sum(cam_acc[...]) * inv_img_count
        adv = adv_acc[0] * inv_pred_count
        total = LAMBDA_ADV * adv + LAMBDA_CAM * cam_l + LAMBDA_RECON * recon
        out_ref[0] = total
        out_ref[1] = adv
        out_ref[2] = cam_l
        out_ref[3] = recon


def cam_guided_loss(fake_pred, refined_fake_images, target_images, cam_maps,
                    *, max_tile_lanes=_TILE_LANE_MAX):
    """Returns (total_loss, adv_loss, cam_loss, recon_loss) as f32 scalars."""
    n, c, h, w = refined_fake_images.shape
    s = h * w
    img_count = n * c * s                       # true elems for recon/cam means
    pred_count = 1
    for d in fake_pred.shape:
        pred_count *= d                         # true elems for adv mean

    # ---- lane-dense reshapes (contiguous; free layout plumbing) ----
    r2 = refined_fake_images.reshape(n, c, s)
    t2 = target_images.reshape(n, c, s)
    c2 = cam_maps.reshape(n, s)

    itemsize = jnp.dtype(refined_fake_images.dtype).itemsize
    tile_s, s_pad, num_tiles = _plan_spatial_tiling(n, c, s, itemsize,
                                                    max_tile_lanes)
    if s_pad != s:
        pad = s_pad - s
        r2 = jnp.pad(r2, ((0, 0), (0, 0), (0, pad)))   # zeros -> |r-t| = 0
        t2 = jnp.pad(t2, ((0, 0), (0, 0), (0, pad)))
        c2 = jnp.pad(c2, ((0, 0), (0, pad)))           # zeros -> cam*|d| = 0

    # Discriminator logits: flatten, pad with 1.0 ((x-1)^2 = 0), lane-dense 2D.
    p_flat = fake_pred.reshape(-1)
    p_pad = _round_up(pred_count, 128)
    if p_pad != pred_count:
        p_flat = jnp.pad(p_flat, (0, p_pad - pred_count), constant_values=1.0)
    p_rows = p_pad // 128
    p2 = p_flat.reshape(p_rows, 128)

    kernel = functools.partial(
        _cam_guided_loss_kernel,
        inv_img_count=1.0 / float(img_count),
        inv_pred_count=1.0 / float(pred_count),
    )

    out = pl.pallas_call(
        kernel,
        out_shape=jax.ShapeDtypeStruct((4,), jnp.float32),
        grid_spec=pltpu.PrefetchScalarGridSpec(
            num_scalar_prefetch=0,
            grid=(num_tiles,),
            in_specs=[
                # tiny pred block, constant index -> stays resident across grid
                pl.BlockSpec((p_rows, 128), lambda i: (0, 0)),
                pl.BlockSpec((n, c, tile_s), lambda i: (0, 0, i)),
                pl.BlockSpec((n, c, tile_s), lambda i: (0, 0, i)),
                pl.BlockSpec((n, tile_s), lambda i: (0, i)),
            ],
            out_specs=pl.BlockSpec(memory_space=pltpu.MemorySpace.SMEM),
            scratch_shapes=[
                pltpu.VMEM((n, tile_s), jnp.float32),   # sum_c |r-t| accumulator
                pltpu.VMEM((n, tile_s), jnp.float32),   # cam * sum_c |r-t| accumulator
                pltpu.SMEM((1,), jnp.float32),          # adv partial sum
            ],
        ),
        compiler_params=pltpu.CompilerParams(
            dimension_semantics=("arbitrary",),         # reduction axis
        ),
    )(p2, r2, t2, c2)

    return out[0], out[1], out[2], out[3]


def _reference(fake_pred, refined, target, cam):
    adv = jnp.mean((fake_pred.astype(jnp.float32) - 1.0) ** 2)
    diff = jnp.abs(refined.astype(jnp.float32) - target.astype(jnp.float32))
    recon = jnp.mean(diff)
    cam_l = jnp.mean(cam.astype(jnp.float32) * diff)
    total = LAMBDA_ADV * adv + LAMBDA_CAM * cam_l + LAMBDA_RECON * recon
    return total, adv, cam_l, recon


if __name__ == "__main__":
    key = jax.random.PRNGKey(0)

    def make_inputs(k, b, ch, hh, ww, ph, pw):
        k1, k2, k3, k4 = jax.random.split(k, 4)
        fake_pred = jax.random.normal(k1, (b, 1, ph, pw), dtype=jnp.float32)
        refined = jax.random.normal(k2, (b, ch, hh, ww), dtype=jnp.float32)
        target = jax.random.normal(k3, (b, ch, hh, ww), dtype=jnp.float32)
        cam = jax.nn.sigmoid(
            jax.random.normal(k4, (b, 1, hh, ww), dtype=jnp.float32))
        return fake_pred, refined, target, cam

    # (batch, channels, H, W, pred_h, pred_w, max_tile_lanes)
    configs = [
        (2, 3, 32, 32, 8, 8, 256),               # 4 spatial tiles -> multi-step accum path
        (2, 4, 16, 16, 8, 8, _TILE_LANE_MAX),    # single tile, module-sized example
        (2, 3, 20, 20, 7, 7, _TILE_LANE_MAX),    # ragged: spatial + pred padding paths
    ]

    for i, (b, ch, hh, ww, ph, pw, tl) in enumerate(configs):
        args = make_inputs(jax.random.fold_in(key, i), b, ch, hh, ww, ph, pw)
        fn = jax.jit(functools.partial(cam_guided_loss, max_tile_lanes=tl))
        out = jax.block_until_ready(fn(*args))
        ref = _reference(*args)
        for got, want in zip(out, ref):
            assert jnp.allclose(got, want, rtol=1e-5, atol=1e-5), (i, got, want)

    # TODO(synk): optional v7x megacore split (leading "parallel" row-chunk axis
    # with per-core partial sums) omitted; single-TC grid is correct everywhere.
    print("KERNEL_OK")
</pallas_src>

<mosaic_0001>
module attributes {stable_mosaic.version = 11 : i64} {
  func.func @_cam_guided_loss_kernel(%arg0: i32, %arg1: memref<1x128xf32, #tpu.memory_space<vmem>>, %arg2: memref<2x3x256xf32, #tpu.memory_space<vmem>>, %arg3: memref<2x3x256xf32, #tpu.memory_space<vmem>>, %arg4: memref<2x256xf32, #tpu.memory_space<vmem>>, %arg5: memref<4xf32, #tpu.memory_space<smem>>, %arg6: memref<2x256xf32, #tpu.memory_space<vmem>>, %arg7: memref<2x256xf32, #tpu.memory_space<vmem>>, %arg8: memref<1xf32, #tpu.memory_space<smem>>) attributes {dimension_semantics = [#tpu.dimension_semantics<arbitrary>], iteration_bounds = array<i64: 4>, scalar_prefetch = 0 : i64, scratch_operands = 3 : i64, tpu.core_type = #tpu.core_type<tc>, window_params = [{pipeline_mode = #tpu.pipeline_mode<synchronous>, transform_indices = @transform_0, window_bounds = array<i64: 1, 128>}, {transform_indices = @transform_1, window_bounds = array<i64: 2, 3, 256>}, {transform_indices = @transform_2, window_bounds = array<i64: 2, 3, 256>}, {transform_indices = @transform_3, window_bounds = array<i64: 2, 256>}, {transform_indices = @transform_4, window_bounds = array<i64: 4>}]} {
    %c0_i32 = arith.constant 0 : i32
    %0 = arith.cmpi eq, %arg0, %c0_i32 : i32
    %1 = arith.extui %0 : i1 to i32
    %c0_i32_0 = arith.constant 0 : i32
    %2 = arith.cmpi ne, %1, %c0_i32_0 : i32
    scf.if %2 {
      %cst_17 = arith.constant 0.000000e+00 : f32
      %19 = vector.broadcast %cst_17 : f32 to vector<2x256xf32>
      %c0_18 = arith.constant 0 : index
      %c0_19 = arith.constant 0 : index
      %20 = vector.load %arg6[%c0_18, %c0_19] : memref<2x256xf32, #tpu.memory_space<vmem>>, vector<2x256xf32>
      tpu.vector_store %arg6[%c0_18, %c0_19], %19 {strides = array<i32>} : memref<2x256xf32, #tpu.memory_space<vmem>>, vector<2x256xf32>,
      %cst_20 = arith.constant 0.000000e+00 : f32
      %21 = vector.broadcast %cst_20 : f32 to vector<2x256xf32>
      %c0_21 = arith.constant 0 : index
      %c0_22 = arith.constant 0 : index
      %22 = vector.load %arg7[%c0_21, %c0_22] : memref<2x256xf32, #tpu.memory_space<vmem>>, vector<2x256xf32>
      tpu.vector_store %arg7[%c0_21, %c0_22], %21 {strides = array<i32>} : memref<2x256xf32, #tpu.memory_space<vmem>>, vector<2x256xf32>,
      %c0_23 = arith.constant 0 : index
      %c0_24 = arith.constant 0 : index
      %23 = vector.load %arg1[%c0_23, %c0_24] : memref<1x128xf32, #tpu.memory_space<vmem>>, vector<1x128xf32>
      %cst_25 = arith.constant 1.000000e+00 : f32
      %24 = vector.broadcast %cst_25 : f32 to vector<1x128xf32>
      %25 = arith.subf %23, %24 : vector<1x128xf32>
      %26 = arith.mulf %25, %25 : vector<1x128xf32>
      %27 = vector.shape_cast %26 : vector<1x128xf32> to vector<1x1x128xf32>
      %cst_26 = arith.constant dense<0.000000e+00> : vector<1xf32>
      %28 = vector.multi_reduction <add>, %27, %cst_26 [1, 2] : vector<1x1x128xf32> to vector<1xf32>
      %29 = vector.shape_cast %28 : vector<1xf32> to vector<1x1x1xf32>
      %30 = vector.extract %29[0, 0, 0] : f32 from vector<1x1x1xf32>
      %c0_27 = arith.constant 0 : index
      %31 = memref.load %arg8[%c0_27] : memref<1xf32, #tpu.memory_space<smem>>
      memref.store %30, %arg8[%c0_27] : memref<1xf32, #tpu.memory_space<smem>>
    } else {
    }
    %c0 = arith.constant 0 : index
    %c0_1 = arith.constant 0 : index
    %c0_2 = arith.constant 0 : index
    %3 = vector.load %arg2[%c0, %c0_1, %c0_2] : memref<2x3x256xf32, #tpu.memory_space<vmem>>, vector<2x3x256xf32>
    %c0_3 = arith.constant 0 : index
    %c0_4 = arith.constant 0 : index
    %c0_5 = arith.constant 0 : index
    %4 = vector.load %arg3[%c0_3, %c0_4, %c0_5] : memref<2x3x256xf32, #tpu.memory_space<vmem>>, vector<2x3x256xf32>
    %5 = arith.subf %3, %4 : vector<2x3x256xf32>
    %6 = math.absf %5 : vector<2x3x256xf32>
    %cst = arith.constant dense<0.000000e+00> : vector<2x256xf32>
    %7 = vector.multi_reduction <add>, %6, %cst [1] : vector<2x3x256xf32> to vector<2x256xf32>
    %c0_6 = arith.constant 0 : index
    %c0_7 = arith.constant 0 : index
    %8 = vector.load %arg6[%c0_6, %c0_7] : memref<2x256xf32, #tpu.memory_space<vmem>>, vector<2x256xf32>
    %9 = arith.addf %8, %7 : vector<2x256xf32>
    %c0_8 = arith.constant 0 : index
    %c0_9 = arith.constant 0 : index
    %10 = vector.load %arg6[%c0_8, %c0_9] : memref<2x256xf32, #tpu.memory_space<vmem>>, vector<2x256xf32>
    tpu.vector_store %arg6[%c0_8, %c0_9], %9 {strides = array<i32>} : memref<2x256xf32, #tpu.memory_space<vmem>>, vector<2x256xf32>,
    %c0_10 = arith.constant 0 : index
    %c0_11 = arith.constant 0 : index
    %11 = vector.load %arg7[%c0_10, %c0_11] : memref<2x256xf32, #tpu.memory_space<vmem>>, vector<2x256xf32>
    %c0_12 = arith.constant 0 : index
    %c0_13 = arith.constant 0 : index
    %12 = vector.load %arg4[%c0_12, %c0_13] : memref<2x256xf32, #tpu.memory_space<vmem>>, vector<2x256xf32>
    %13 = arith.mulf %12, %7 : vector<2x256xf32>
    %14 = arith.addf %11, %13 : vector<2x256xf32>
    %c0_14 = arith.constant 0 : index
    %c0_15 = arith.constant 0 : index
    %15 = vector.load %arg7[%c0_14, %c0_15] : memref<2x256xf32, #tpu.memory_space<vmem>>, vector<2x256xf32>
    tpu.vector_store %arg7[%c0_14, %c0_15], %14 {strides = array<i32>} : memref<2x256xf32, #tpu.memory_space<vmem>>, vector<2x256xf32>,
    %c3_i32 = arith.constant 3 : i32
    %16 = arith.cmpi eq, %arg0, %c3_i32 : i32
    %17 = arith.extui %16 : i1 to i32
    %c0_i32_16 = arith.constant 0 : i32
    %18 = arith.cmpi ne, %17, %c0_i32_16 : i32
    scf.if %18 {
      %c0_17 = arith.constant 0 : index
      %c0_18 = arith.constant 0 : index
      %19 = vector.load %arg6[%c0_17, %c0_18] : memref<2x256xf32, #tpu.memory_space<vmem>>, vector<2x256xf32>
      %20 = vector.shape_cast %19 : vector<2x256xf32> to vector<1x2x256xf32>
      %cst_19 = arith.constant dense<0.000000e+00> : vector<1xf32>
      %21 = vector.multi_reduction <add>, %20, %cst_19 [1, 2] : vector<1x2x256xf32> to vector<1xf32>
      %22 = vector.shape_cast %21 : vector<1xf32> to vector<1x1x1xf32>
      %23 = vector.extract %22[0, 0, 0] : f32 from vector<1x1x1xf32>
      %cst_20 = arith.constant 1.62760422E-4 : f32
      %24 = arith.mulf %23, %cst_20 : f32
      %c0_21 = arith.constant 0 : index
      %c0_22 = arith.constant 0 : index
      %25 = vector.load %arg7[%c0_21, %c0_22] : memref<2x256xf32, #tpu.memory_space<vmem>>, vector<2x256xf32>
      %26 = vector.shape_cast %25 : vector<2x256xf32> to vector<1x2x256xf32>
      %cst_23 = arith.constant dense<0.000000e+00> : vector<1xf32>
      %27 = vector.multi_reduction <add>, %26, %cst_23 [1, 2] : vector<1x2x256xf32> to vector<1xf32>
      %28 = vector.shape_cast %27 : vector<1xf32> to vector<1x1x1xf32>
      %29 = vector.extract %28[0, 0, 0] : f32 from vector<1x1x1xf32>
      %cst_24 = arith.constant 1.62760422E-4 : f32
      %30 = arith.mulf %29, %cst_24 : f32
      %c0_25 = arith.constant 0 : index
      %31 = memref.load %arg8[%c0_25] : memref<1xf32, #tpu.memory_space<smem>>
      %cst_26 = arith.constant 7.812500e-03 : f32
      %32 = arith.mulf %31, %cst_26 : f32
      %cst_27 = arith.constant 1.000000e+00 : f32
      %33 = arith.mulf %cst_27, %32 : f32
      %cst_28 = arith.constant 1.000000e+01 : f32
      %34 = arith.mulf %cst_28, %30 : f32
      %35 = arith.addf %33, %34 : f32
      %cst_29 = arith.constant 1.000000e+01 : f32
      %36 = arith.mulf %cst_29, %24 : f32
      %37 = arith.addf %35, %36 : f32
      %c0_30 = arith.constant 0 : index
      %38 = memref.load %arg5[%c0_30] : memref<4xf32, #tpu.memory_space<smem>>
      memref.store %37, %arg5[%c0_30] : memref<4xf32, #tpu.memory_space<smem>>
      %c1 = arith.constant 1 : index
      %39 = memref.load %arg5[%c1] : memref<4xf32, #tpu.memory_space<smem>>
      memref.store %32, %arg5[%c1] : memref<4xf32, #tpu.memory_space<smem>>
      %c2 = arith.constant 2 : index
      %40 = memref.load %arg5[%c2] : memref<4xf32, #tpu.memory_space<smem>>
      memref.store %30, %arg5[%c2] : memref<4xf32, #tpu.memory_space<smem>>
      %c3 = arith.constant 3 : index
      %41 = memref.load %arg5[%c3] : memref<4xf32, #tpu.memory_space<smem>>
      memref.store %24, %arg5[%c3] : memref<4xf32, #tpu.memory_space<smem>>
    } else {
    }
    return
  }
  func.func @transform_0(%arg0: i32) -> (i32, i32) {
    %c0_i32 = arith.constant 0 : i32
    %c0_i32_0 = arith.constant 0 : i32
    %c0_i32_1 = arith.constant 0 : i32
    return %c0_i32, %c0_i32_0 : i32, i32
  }
  func.func @transform_1(%arg0: i32) -> (i32, i32, i32) {
    %c0_i32 = arith.constant 0 : i32
    %c0_i32_0 = arith.constant 0 : i32
    %c0_i32_1 = arith.constant 0 : i32
    return %c0_i32, %c0_i32_0, %arg0 : i32, i32, i32
  }
  func.func @transform_2(%arg0: i32) -> (i32, i32, i32) {
    %c0_i32 = arith.constant 0 : i32
    %c0_i32_0 = arith.constant 0 : i32
    %c0_i32_1 = arith.constant 0 : i32
    return %c0_i32, %c0_i32_0, %arg0 : i32, i32, i32
  }
  func.func @transform_3(%arg0: i32) -> (i32, i32) {
    %c0_i32 = arith.constant 0 : i32
    %c0_i32_0 = arith.constant 0 : i32
    return %c0_i32, %arg0 : i32, i32
  }
  func.func @transform_4(%arg0: i32) -> i32 {
    %c0_i32 = arith.constant 0 : i32
    %c0_i32_0 = arith.constant 0 : i32
    return %c0_i32 : i32
  }
}

</mosaic_0001>

<llo_original>
// kernel: cam_guided_loss.1
$region0: #{cam_guided_loss.1}
  #allocation0 [shape = 'u32[]', space=smem, size = 0x4, offset = 0x4, fixed_abs, tag = 'smem constant byte address 0x4 - core index']
  #allocation1 [shape = 'u32[72,128]{1,0:T(1,128)}', space=vmem, size = 0x9000, scoped, tag = 'internal scratch']
  #allocation2 [shape = 'f32[2,256]{1,0:T(2,128)}', space=vmem, size = 0x800, scoped, tag = 'scratch operand']
  #allocation3 [shape = 'f32[2,256]{1,0:T(2,128)}', space=vmem, size = 0x800, scoped, tag = 'scratch operand']
  #allocation4 [shape = 'f32[1]{0:T(128)}', space=smem, size = 0x200, scoped, tag = 'scratch operand']
  %s0 = inlined_call_operand.vmem [shape: f32[1,128], index: 0, kind: input, shape index: {}]
  %s1 = inlined_call_operand.vmem [shape: f32[2,3,1024], index: 1, kind: input, shape index: {}]
  %s2 = inlined_call_operand.vmem [shape: f32[2,3,1024], index: 2, kind: input, shape index: {}]
  %s3 = inlined_call_operand.vmem [shape: f32[2,1024], index: 3, kind: input, shape index: {}]
  %s4 = inlined_call_operand.vmem [shape: f32[4], index: 4, kind: output, shape index: {}]
  %s5 = sld [smem:[#allocation0]]
  $region133: #{cam_guided_loss.1} parent=0
    _
  %s7 = ssub.s32 1, %s5
  %s8 = scalar_select 0, %s7, %s5
  $region1: #{cam_guided_loss.1} parent=0
    #allocation5 [shape = 'u8[16384]{0}', space=vmem, size = 0x4000, scoped, tag = 'input window, operand 1']
    #allocation6 [shape = 'u8[16384]{0}', space=vmem, size = 0x4000, scoped, tag = 'input window, operand 2']
    #allocation7 [shape = 'u8[512]{0}', space=smem, size = 0x200, scoped, tag = 'output window, operand 0, single buffered']
    #allocation8 [shape = 's32[2]{0}', space=sflag, size = 0x8, scoped, tag = 'scoped memory for cam_guided_loss.1']
    %9 = vsyncpa [#allocation8], 0
    loop: start=0, step=1, limit=6
    $region2: #{cam_guided_loss.1} parent=1 // loop_pre_header
      _
    $region3: #{cam_guided_loss.1} parent=1 // loop_header
      %s11 = sphi 0, %s15
      %p12 = scmp.ge.s32.totalorder %s11, 6
      %s19 = sphi 0, %s19
      %s21 = sphi 0, %s19
      %s22 = sphi 0, %s21
      %s36 = sphi 0, %s22
      %s42 = sphi 0, %s44
      %s45 = sphi 0, %s42
      %s46 = sphi 0, %s45
      %s62 = sphi 0, %s46
      %s68 = sphi 0, %s70
      %s71 = sphi 0, %s68
      %s72 = sphi 0, %s71
      %s88 = sphi 0, %s72
      %s94 = sphi 0, %s96
      %s97 = sphi 0, %s94
      %s98 = sphi 0, %s97
      %s114 = sphi 0, %s98
      %s118 = sphi 0, %s118
      %s120 = sphi 0, %s118
      %s121 = sphi 0, %s120
      %s135 = sphi 0, %s121
    $region4: #{cam_guided_loss.1} parent=1 // loop_header_branch
      %14 = sbr.rel (%p12) target = $region8
    $region5: #{cam_guided_loss.1} parent=1 // loop_body
      %s16 = ssub.s32 %s11, 1
      %s17 = ssub.s32 %s11, 2
      %s18 = sadd.s32 %s11, 1
      %s20 = sadd.s32 %s19, 1
      %p23 = scmp.eq.s32.totalorder %s11, 3
      %p24 = scmp.ne.s32.totalorder %s19, %s21
      %p25 = scmp.eq.s32.totalorder %s11, 0
      %p26 = por %p24, %p25
      %p27 = scmp.ne.s32.totalorder %s19, %s21
      %p28 = scmp.eq.s32.totalorder %s16, 3
      %p29 = por %p27, %p28
      %p30 = scmp.ne.s32.totalorder %s21, %s22
      %p31 = scmp.eq.s32.totalorder %s16, 0
      %p32 = por %p30, %p31
      %p33 = scmp.ne.s32.totalorder %s21, %s22
      %p34 = scmp.eq.s32.totalorder %s17, 3
      %p35 = por %p33, %p34
      %p37 = scmp.ne.s32.totalorder %s22, %s36
      %p38 = scmp.eq.s32.totalorder %s17, 0
      %p39 = por %p37, %p38
      %s40 = ssub.s32 %s11, %s18
      %p41 = scmp.eq.s32.totalorder %s40, 0
      %s43 = sadd.s32 %s42, 1
      %s44 = scalar_select %p41, %s42, %s43
      %p47 = pneg %p41
      %p48 = scmp.eq.s32.totalorder %s11, 3
      %p49 = por %p47, %p48
      %p50 = scmp.ne.s32.totalorder %s42, %s45
      %p51 = scmp.eq.s32.totalorder %s11, 0
      %p52 = por %p50, %p51
      %p53 = scmp.ne.s32.totalorder %s42, %s45
      %p54 = scmp.eq.s32.totalorder %s16, 3
      %p55 = por %p53, %p54
      %p56 = scmp.ne.s32.totalorder %s45, %s46
      %p57 = scmp.eq.s32.totalorder %s16, 0
      %p58 = por %p56, %p57
      %p59 = scmp.ne.s32.totalorder %s45, %s46
      %p60 = scmp.eq.s32.totalorder %s17, 3
      %p61 = por %p59, %p60
      %p63 = scmp.ne.s32.totalorder %s46, %s62
      %p64 = scmp.eq.s32.totalorder %s17, 0
      %p65 = por %p63, %p64
      %s66 = ssub.s32 %s11, %s18
      %p67 = scmp.eq.s32.totalorder %s66, 0
      %s69 = sadd.s32 %s68, 1
      %s70 = scalar_select %p67, %s68, %s69
      %p73 = pneg %p67
      %p74 = scmp.eq.s32.totalorder %s11, 3
      %p75 = por %p73, %p74
      %p76 = scmp.ne.s32.totalorder %s68, %s71
      %p77 = scmp.eq.s32.totalorder %s11, 0
      %p78 = por %p76, %p77
      %p79 = scmp.ne.s32.totalorder %s68, %s71
      %p80 = scmp.eq.s32.totalorder %s16, 3
      %p81 = por %p79, %p80
      %p82 = scmp.ne.s32.totalorder %s71, %s72
      %p83 = scmp.eq.s32.totalorder %s16, 0
      %p84 = por %p82, %p83
      %p85 = scmp.ne.s32.totalorder %s71, %s72
      %p86 = scmp.eq.s32.totalorder %s17, 3
      %p87 = por %p85, %p86
      %p89 = scmp.ne.s32.totalorder %s72, %s88
      %p90 = scmp.eq.s32.totalorder %s17, 0
      %p91 = por %p89, %p90
      %s92 = ssub.s32 %s11, %s18
      %p93 = scmp.eq.s32.totalorder %s92, 0
      %s95 = sadd.s32 %s94, 1
      %s96 = scalar_select %p93, %s94, %s95
      %p99 = pneg %p93
      %p100 = scmp.eq.s32.totalorder %s11, 3
      %p101 = por %p99, %p100
      %p102 = scmp.ne.s32.totalorder %s94, %s97
      %p103 = scmp.eq.s32.totalorder %s11, 0
      %p104 = por %p102, %p103
      %p105 = scmp.ne.s32.totalorder %s94, %s97
      %p106 = scmp.eq.s32.totalorder %s16, 3
      %p107 = por %p105, %p106
      %p108 = scmp.ne.s32.totalorder %s97, %s98
      %p109 = scmp.eq.s32.totalorder %s16, 0
      %p110 = por %p108, %p109
      %p111 = scmp.ne.s32.totalorder %s97, %s98
      %p112 = scmp.eq.s32.totalorder %s17, 3
      %p113 = por %p111, %p112
      %p115 = scmp.ne.s32.totalorder %s98, %s114
      %p116 = scmp.eq.s32.totalorder %s17, 0
      %p117 = por %p115, %p116
      %s119 = sadd.s32 %s118, 1
      %p122 = scmp.eq.s32.totalorder %s11, 3
      %p123 = scmp.ne.s32.totalorder %s118, %s120
      %p124 = scmp.eq.s32.totalorder %s11, 0
      %p125 = por %p123, %p124
      %p126 = scmp.ne.s32.totalorder %s118, %s120
      %p127 = scmp.eq.s32.totalorder %s16, 3
      %p128 = por %p126, %p127
      %p129 = scmp.ne.s32.totalorder %s120, %s121
      %p130 = scmp.eq.s32.totalorder %s16, 0
      %p131 = por %p129, %p130
      %p132 = scmp.ne.s32.totalorder %s120, %s121
      %p133 = scmp.eq.s32.totalorder %s17, 3
      %p134 = por %p132, %p133
      %p136 = scmp.ne.s32.totalorder %s121, %s135
      %p137 = scmp.eq.s32.totalorder %s17, 0
      %p138 = por %p136, %p137
      %p139 = scmp.le.s32.totalorder 1, %s11
      %p140 = scmp.lt.s32.totalorder %s11, 5
      %p141 = pnand %p139, %p140
      %p142 = pneg %p141
      // Predicated region
      $region9: #{cam_guided_loss.1} parent=5 // pred_check
        _
      $region10: #{cam_guided_loss.1} parent=5 // pred_check_branch
        %144 = sbr.rel (%p141) target = $region12
      $region11: #{cam_guided_loss.1} parent=5 // pred_region
        %s145 = ssub.s32 %s11, 1
        // Predicated region
        $region13: #{cam_guided_loss.1} parent=11 // pred_check
          %p146 = pneg %p32
        $region14: #{cam_guided_loss.1} parent=11 // pred_check_branch
          %148 = sbr.rel (%p146) target = $region16
        $region15: #{cam_guided_loss.1} parent=11 // pred_region
          _
        $region16: #{cam_guided_loss.1} parent=11 // pred_fallthru
          _
      $region12: #{cam_guided_loss.1} parent=5 // pred_fallthru
        _
      %p149 = scmp.lt.s32.totalorder %s11, 4
      // Predicated region
      $region17: #{cam_guided_loss.1} parent=5 // pred_check
        %p150 = pneg %p149
      $region18: #{cam_guided_loss.1} parent=5 // pred_check_branch
        %152 = sbr.rel (%p150) target = $region20
      $region19: #{cam_guided_loss.1} parent=5 // pred_region
        // Predicated region
        $region21: #{cam_guided_loss.1} parent=19 // pred_check
          %p153 = pneg %p52
        $region22: #{cam_guided_loss.1} parent=19 // pred_check_branch
          %155 = sbr.rel (%p153) target = $region24
        $region23: #{cam_guided_loss.1} parent=19 // pred_region
          %s156 = sand.u32 %s42, 1
          %s157 = sand.u32 %s42, 1
          %s158 = smul.addr %s157, 16
          %s159 = scalar_lea.vmem [#allocation5], %s158
          %s160 = smul.u32 2, %s11
          %s161 = smul.addr %s160, 4
          %s162 = scalar_lea.vmem %s1, %s161
          // Predicated region
          $region25: #{cam_guided_loss.1} parent=23 // pred_check
            _
          $region26: #{cam_guided_loss.1} parent=23 // pred_check_branch
            %164 = sbr.rel (0) target = $region28
          $region27: #{cam_guided_loss.1} parent=23 // pred_region
            // Predicated region
            $region29: #{cam_guided_loss.1} parent=27 // pred_check
              _
            $region30: #{cam_guided_loss.1} parent=27 // pred_check_branch
              %166 = sbr.rel (0) target = $region32
            $region31: #{cam_guided_loss.1} parent=27 // pred_region
              // Predicated region
              $region44: #{cam_guided_loss.1} parent=31 // pred_check
                _
              $region45: #{cam_guided_loss.1} parent=31 // pred_check_branch
                %184 = sbr.rel (0) target = $region47
              $region46: #{cam_guided_loss.1} parent=31 // pred_region
                loop: start=0, step=1, limit=1
                $region48: #{cam_guided_loss.1} parent=46 // loop_pre_header
                  _
                $region49: #{cam_guided_loss.1} parent=46 // loop_header
                  %s186 = sphi 0, %s190
                  %p187 = scmp.ge.s32.totalorder %s186, 1
                  %s191 = sphi %s162, %s162
                  %s192 = sphi %s159, %s159
                $region50: #{cam_guided_loss.1} parent=46 // loop_header_branch
                  %189 = sbr.rel (%p187) target = $region54
                $region51: #{cam_guided_loss.1} parent=46 // loop_body
                  %v193 = vld [vmem:[%s191] sm:$0xff]
                  %194 = vst [vmem:[%s192] sm:$0xff] %v193
                  %v195 = vld [vmem:[%s191 + $0x20] sm:$0xff]
                  %196 = vst [vmem:[%s192 + $0x8] sm:$0xff] %v195
                $region52: #{cam_guided_loss.1} parent=46 // loop_footer
                  %s190 = sadd.s32 1, %s186
                $region53: #{cam_guided_loss.1} parent=46 // loop_footer_branch
                  %185 = sbr.rel target = $region49
                $region54: #{cam_guided_loss.1} parent=46 // loop_exit
                  _
              $region47: #{cam_guided_loss.1} parent=31 // pred_fallthru
                _
              // Predicated region
              $region55: #{cam_guided_loss.1} parent=31 // pred_check
                _
              $region56: #{cam_guided_loss.1} parent=31 // pred_check_branch
                %198 = sbr.rel target = $region58
              $region57: #{cam_guided_loss.1} parent=31 // pred_region
                _
              $region58: #{cam_guided_loss.1} parent=31 // pred_fallthru
                _
            $region32: #{cam_guided_loss.1} parent=27 // pred_fallthru
              _
            // Predicated region
            $region33: #{cam_guided_loss.1} parent=27 // pred_check
              _
            $region34: #{cam_guided_loss.1} parent=27 // pred_check_branch
              %168 = sbr.rel target = $region36
            $region35: #{cam_guided_loss.1} parent=27 // pred_region
              %s170 = ssub.s32 256, 1
              loop: start=0, step=1, limit=1
              $region37: #{cam_guided_loss.1} parent=35 // loop_pre_header
                _
              $region38: #{cam_guided_loss.1} parent=35 // loop_header
                %s172 = sphi 0, %s176
                %p173 = scmp.ge.s32.totalorder %s172, 1
                %s177 = sphi %s162, %s162
                %s178 = sphi %s159, %s159
              $region39: #{cam_guided_loss.1} parent=35 // loop_header_branch
                %175 = sbr.rel (%p173) target = $region43
              $region40: #{cam_guided_loss.1} parent=35 // loop_body
                %v179 = vld [vmem:[%s177] sm:%s170]
                %180 = vst [vmem:[%s178] sm:%s170] %v179
                %v181 = vld [vmem:[%s177 + $0x20] sm:%s170]
                %182 = vst [vmem:[%s178 + $0x8] sm:%s170] %v181
              $region41: #{cam_guided_loss.1} parent=35 // loop_footer
                %s176 = sadd.s32 1, %s172
              $region42: #{cam_guided_loss.1} parent=35 // loop_footer_branch
                %171 = sbr.rel target = $region38
              $region43: #{cam_guided_loss.1} parent=35 // loop_exit
                _
            $region36: #{cam_guided_loss.1} parent=27 // pred_fallthru
              _
          $region28: #{cam_guided_loss.1} parent=23 // pred_fallthru
            _
          %199 = vnop
        $region24: #{cam_guided_loss.1} parent=19 // pred_fallthru
          _
        // Predicated region
        $region59: #{cam_guided_loss.1} parent=19 // pred_check
          %p200 = pneg %p78
        $region60: #{cam_guided_loss.1} parent=19 // pred_check_branch
          %202 = sbr.rel (%p200) target = $region62
        $region61: #{cam_guided_loss.1} parent=19 // pred_region
          %s203 = sand.u32 %s68, 1
          %s204 = sand.u32 %s68, 1
          %s205 = smul.addr %s204, 16
          %s206 = scalar_lea.vmem [#allocation6], %s205
          %s207 = smul.u32 2, %s11
          %s208 = smul.addr %s207, 4
          %s209 = scalar_lea.vmem %s2, %s208
          // Predicated region
          $region63: #{cam_guided_loss.1} parent=61 // pred_check
            _
          $region64: #{cam_guided_loss.1} parent=61 // pred_check_branch
            %211 = sbr.rel (0) target = $region66
          $region65: #{cam_guided_loss.1} parent=61 // pred_region
            // Predicated region
            $region67: #{cam_guided_loss.1} parent=65 // pred_check
              _
            $region68: #{cam_guided_loss.1} parent=65 // pred_check_branch
              %213 = sbr.rel (0) target = $region70
            $region69: #{cam_guided_loss.1} parent=65 // pred_region
              // Predicated region
              $region82: #{cam_guided_loss.1} parent=69 // pred_check
                _
              $region83: #{cam_guided_loss.1} parent=69 // pred_check_branch
                %231 = sbr.rel (0) target = $region85
              $region84: #{cam_guided_loss.1} parent=69 // pred_region
                loop: start=0, step=1, limit=1
                $region86: #{cam_guided_loss.1} parent=84 // loop_pre_header
                  _
                $region87: #{cam_guided_loss.1} parent=84 // loop_header
                  %s233 = sphi 0, %s237
                  %p234 = scmp.ge.s32.totalorder %s233, 1
                  %s238 = sphi %s209, %s209
                  %s239 = sphi %s206, %s206
                $region88: #{cam_guided_loss.1} parent=84 // loop_header_branch
                  %236 = sbr.rel (%p234) target = $region92
                $region89: #{cam_guided_loss.1} parent=84 // loop_body
                  %v240 = vld [vmem:[%s238] sm:$0xff]
                  %241 = vst [vmem:[%s239] sm:$0xff] %v240
                  %v242 = vld [vmem:[%s238 + $0x20] sm:$0xff]
                  %243 = vst [vmem:[%s239 + $0x8] sm:$0xff] %v242
                $region90: #{cam_guided_loss.1} parent=84 // loop_footer
                  %s237 = sadd.s32 1, %s233
                $region91: #{cam_guided_loss.1} parent=84 // loop_footer_branch
                  %232 = sbr.rel target = $region87
                $region92: #{cam_guided_loss.1} parent=84 // loop_exit
                  _
              $region85: #{cam_guided_loss.1} parent=69 // pred_fallthru
                _
              // Predicated region
              $region93: #{cam_guided_loss.1} parent=69 // pred_check
                _
              $region94: #{cam_guided_loss.1} parent=69 // pred_check_branch
                %245 = sbr.rel target = $region96
              $region95: #{cam_guided_loss.1} parent=69 // pred_region
                _
              $region96: #{cam_guided_loss.1} parent=69 // pred_fallthru
                _
            $region70: #{cam_guided_loss.1} parent=65 // pred_fallthru
              _
            // Predicated region
            $region71: #{cam_guided_loss.1} parent=65 // pred_check
              _
            $region72: #{cam_guided_loss.1} parent=65 // pred_check_branch
              %215 = sbr.rel target = $region74
            $region73: #{cam_guided_loss.1} parent=65 // pred_region
              %s217 = ssub.s32 256, 1
              loop: start=0, step=1, limit=1
              $region75: #{cam_guided_loss.1} parent=73 // loop_pre_header
                _
              $region76: #{cam_guided_loss.1} parent=73 // loop_header
                %s219 = sphi 0, %s223
                %p220 = scmp.ge.s32.totalorder %s219, 1
                %s224 = sphi %s209, %s209
                %s225 = sphi %s206, %s206
              $region77: #{cam_guided_loss.1} parent=73 // loop_header_branch
                %222 = sbr.rel (%p220) target = $region81
              $region78: #{cam_guided_loss.1} parent=73 // loop_body
                %v226 = vld [vmem:[%s224] sm:%s217]
                %227 = vst [vmem:[%s225] sm:%s217] %v226
                %v228 = vld [vmem:[%s224 + $0x20] sm:%s217]
                %229 = vst [vmem:[%s225 + $0x8] sm:%s217] %v228
              $region79: #{cam_guided_loss.1} parent=73 // loop_footer
                %s223 = sadd.s32 1, %s219
              $region80: #{cam_guided_loss.1} parent=73 // loop_footer_branch
                %218 = sbr.rel target = $region76
              $region81: #{cam_guided_loss.1} parent=73 // loop_exit
                _
            $region74: #{cam_guided_loss.1} parent=65 // pred_fallthru
              _
          $region66: #{cam_guided_loss.1} parent=61 // pred_fallthru
            _
          %246 = vnop
        $region62: #{cam_guided_loss.1} parent=19 // pred_fallthru
          _
        // Predicated region
        $region97: #{cam_guided_loss.1} parent=19 // pred_check
          %p247 = pneg %p104
        $region98: #{cam_guided_loss.1} parent=19 // pred_check_branch
          %249 = sbr.rel (%p247) target = $region100
        $region99: #{cam_guided_loss.1} parent=19 // pred_region
          %s250 = smul.u32 2, %s11
          %p251 = scmp.lt.s32.totalorder %s250, 7
          %s252 = scalar_select %p251, %s250, 7
          %s253 = smul.addr %s252, 2
          %s254 = scalar_lea.vmem %s3, %s253
          %s255 = smul.u32 2, %s11
        $region100: #{cam_guided_loss.1} parent=19 // pred_fallthru
          _
      $region20: #{cam_guided_loss.1} parent=5 // pred_fallthru
        _
      %p256 = scmp.le.s32.totalorder 1, %s11
      %p257 = scmp.lt.s32.totalorder %s11, 5
      %p258 = pnand %p256, %p257
      %p259 = pneg %p258
      // Predicated region
      $region101: #{cam_guided_loss.1} parent=5 // pred_check
        _
      $region102: #{cam_guided_loss.1} parent=5 // pred_check_branch
        %261 = sbr.rel (%p258) target = $region104
      $region103: #{cam_guided_loss.1} parent=5 // pred_region
        %s262 = ssub.s32 %s11, 1
        %s263 = sand.u32 %s45, 1
        %s264 = sand.u32 %s45, 1
        %s265 = smul.addr %s264, 16
        %s266 = scalar_lea.vmem [#allocation5], %s265
        // Predicated region
        $region105: #{cam_guided_loss.1} parent=103 // pred_check
          %p267 = pneg %p58
        $region106: #{cam_guided_loss.1} parent=103 // pred_check_branch
          %269 = sbr.rel (%p267) target = $region108
        $region107: #{cam_guided_loss.1} parent=103 // pred_region
          _
        $region108: #{cam_guided_loss.1} parent=103 // pred_fallthru
          _
        %s270 = sand.u32 %s71, 1
        %s271 = sand.u32 %s71, 1
        %s272 = smul.addr %s271, 16
        %s273 = scalar_lea.vmem [#allocation6], %s272
        // Predicated region
        $region109: #{cam_guided_loss.1} parent=103 // pred_check
          %p274 = pneg %p84
        $region110: #{cam_guided_loss.1} parent=103 // pred_check_branch
          %276 = sbr.rel (%p274) target = $region112
        $region111: #{cam_guided_loss.1} parent=103 // pred_region
          _
        $region112: #{cam_guided_loss.1} parent=103 // pred_fallthru
          _
        %p277 = pneg %p32
        %p278 = pneg %p29
        %s279 = sand.u32 %s45, 1
        %s280 = sand.u32 %s45, 1
        %s281 = smul.addr %s280, 16
        %s282 = scalar_lea.vmem [#allocation5], %s281
        %p283 = pneg %p58
        %p284 = pneg %p55
        %s285 = sand.u32 %s71, 1
        %s286 = sand.u32 %s71, 1
        %s287 = smul.addr %s286, 16
        %s288 = scalar_lea.vmem [#allocation6], %s287
        %p289 = pneg %p84
        %p290 = pneg %p81
        %s291 = smul.u32 2, %s16
        %p292 = scmp.lt.s32.totalorder %s291, 7
        %s293 = scalar_select %p292, %s291, 7
        %s294 = smul.addr %s293, 2
        %s295 = scalar_lea.vmem %s3, %s294
        %p296 = pneg %p110
        %p297 = pneg %p107
        %p298 = pneg %p131
        %p299 = pneg %p128
        %s300 = smul.u32 2, %s16
        %s301 = smul.u32 2, %s16
        %s302 = smul.u32 2, %s16
        %p303 = scmp.lt.s32.totalorder %s302, 7
        %s304 = scalar_select %p303, %s302, 7
        %s305 = smul.addr %s304, 2
        %s306 = scalar_lea.vmem %s3, %s305
        %s307 = smul.u32 2, %s16
        %p308 = scmp.eq.s32.totalorder %s16, 0
        // Predicated region
        $region113: #{cam_guided_loss.1} parent=103 // pred_check
          %p309 = pneg %p308
        $region114: #{cam_guided_loss.1} parent=103 // pred_check_branch
          %311 = sbr.rel (%p309) target = $region116
        $region115: #{cam_guided_loss.1} parent=103 // pred_region
          %312 = vst [vmem:[#allocation2] sm:$0xf] 0.0
          %313 = vst [vmem:[#allocation3] sm:$0xf] 0.0
          %v314 = vld [vmem:[%s0] sm:$0x1]
          %v315 = vsub.f32 %v314, 1.0
          %v316 = vmul.f32 %v315, %v315
          %vm317 = vcmask 1040384
          %v318 = vsel %vm317, %v316, 0.0
          %319 = vadd.xlane.f32.xlu0 %v318
          %v320 = vpop.xlane.xlu0 %319
          %v321 = vrot.slane %v320, 4
          %v322 = vadd.f32 %v320, %v321
          %v323 = vrot.slane %v322, 2
          %v324 = vadd.f32 %v322, %v323
          %v325 = vrot.slane %v324, 1
          %v326 = vadd.f32 %v324, %v325
          %s327 = vtos %v326
          %s328 = scalar_lea.smem [#allocation4], 0
          %329 = sst [smem:[%s328]] %s327
        $region116: #{cam_guided_loss.1} parent=103 // pred_fallthru
          _
        %v330 = vld [vmem:[%s266] sm:$0x77]
        %v331 = vld [vmem:[%s266 + $0x8] sm:$0x77]
        %v332 = vld [vmem:[%s273] sm:$0x77]
        %v333 = vld [vmem:[%s273 + $0x8] sm:$0x77]
        %v334 = vsub.f32 %v330, %v332
        %v335 = vsub.f32 %v331, %v333
        %v336 = vand.u32 2147483647, %v334
        %v337 = vand.u32 2147483647, %v335
        %340 = vst [vmem:[#allocation1] ss:$2 sm:$0xff] %v336
        %v341 = vld.sshfl [vmem:[#allocation1] sm:$0xff pattern:$0x75316420]
        %v342 = vld.sshfl [vmem:[#allocation1 + $0x8] sm:$0xff pattern:$0x75316420]
        %s343 = scalar_lea.vmem [#allocation1], 16
        %344 = vst [vmem:[%s343] ss:$2 sm:$0xff] %v337
        %v345 = vld.sshfl [vmem:[#allocation1 + $0x10] sm:$0xff pattern:$0x75316420]
        %v346 = vld.sshfl [vmem:[#allocation1 + $0x18] sm:$0xff pattern:$0x75316420]
        %vm351 = vcmask 1042432
        %v352 = vsel %vm351, %v341, 0.0
        %v353 = vrot.slane %v352, 4
        %v354 = vadd.f32 %v352, %v353
        %v355 = vrot.slane %v354, 2
        %v356 = vadd.f32 %v354, %v355
        %v357 = vrot.slane %v356, 1
        %v358 = vadd.f32 %v356, %v357
        %v359 = vsel %vm351, %v342, 0.0
        %v360 = vrot.slane %v359, 4
        %v361 = vadd.f32 %v359, %v360
        %v362 = vrot.slane %v361, 2
        %v363 = vadd.f32 %v361, %v362
        %v364 = vrot.slane %v363, 1
        %v365 = vadd.f32 %v363, %v364
        %v366 = vsel %vm351, %v345, 0.0
        %v367 = vrot.slane %v366, 4
        %v368 = vadd.f32 %v366, %v367
        %v369 = vrot.slane %v368, 2
        %v370 = vadd.f32 %v368, %v369
        %v371 = vrot.slane %v370, 1
        %v372 = vadd.f32 %v370, %v371
        %v373 = vsel %vm351, %v346, 0.0
        %v374 = vrot.slane %v373, 4
        %v375 = vadd.f32 %v373, %v374
        %v376 = vrot.slane %v375, 2
        %v377 = vadd.f32 %v375, %v376
        %v378 = vrot.slane %v377, 1
        %v379 = vadd.f32 %v377, %v378
        %v380 = vld [vmem:[#allocation2] sm:$0xf]
        %v385 = vrot.slane %v365, 6
        %v386 = vrot.slane %v379, 6
        %vm387 = vcmask 1041408
        %v388 = vsel %vm387, %v358, %v385
        %v389 = vsel %vm387, %v372, %v386
        %vm390 = vcmask 1044484
        %v391 = vsel %vm390, %v388, %v388
        %vm392 = vcmask 1046534
        %v393 = vsel %vm392, %v388, %v391
        %v394 = vrot.slane %v389, 7
        %vm395 = vcmask 1041409
        %v396 = vsel %vm395, %v394, %v393
        %vm397 = vcmask 1043459
        %v398 = vsel %vm397, %v394, %v396
        %vm399 = vcmask 1045509
        %v400 = vsel %vm399, %v394, %v398
        %vm401 = vcmask 1047559
        %v402 = vsel %vm401, %v394, %v400
        %v404 = vadd.f32 %v380, %v402
        %405 = vst [vmem:[#allocation2] sm:$0xf] %v404
        %v406 = vld [vmem:[#allocation3] sm:$0xf]
        %v407 = vld [vmem:[%s306] sm:$0xf]
        %v408 = vmul.f32 %v407, %v402
        %v409 = vadd.f32 %v406, %v408
        %410 = vst [vmem:[#allocation3] sm:$0xf] %v409
        %p411 = scmp.eq.s32.totalorder %s16, 3
        // Predicated region
        $region117: #{cam_guided_loss.1} parent=103 // pred_check
          %p412 = pneg %p411
        $region118: #{cam_guided_loss.1} parent=103 // pred_check_branch
          %414 = sbr.rel (%p412) target = $region120
        $region119: #{cam_guided_loss.1} parent=103 // pred_region
          %v415 = vld [vmem:[#allocation2] sm:$0xf]
          %417 = vst [vmem:[#allocation1] ss:$4 sm:$0xff] %v415
          %v418 = vld.sshfl [vmem:[#allocation1] sm:$0xff pattern:$0x73625140]
          %v419 = vld.sshfl [vmem:[#allocation1 + $0x8] sm:$0xff pattern:$0x73625140]
          %v422 = vsel %vm387, %v418, 0.0
          %v423 = vsel %vm387, %v419, 0.0
          %v424 = vadd.f32 %v422, %v423
          %425 = vadd.xlane.f32.xlu0 %v424
          %v426 = vpop.xlane.xlu0 %425
          %v427 = vrot.slane %v426, 4
          %v428 = vadd.f32 %v426, %v427
          %v429 = vrot.slane %v428, 2
          %v430 = vadd.f32 %v428, %v429
          %v431 = vrot.slane %v430, 1
          %v432 = vadd.f32 %v430, %v431
          %s433 = vtos %v432
          %s434 = smul.f32 %s433, 0.00016276042
          %v435 = vld [vmem:[#allocation3] sm:$0xf]
          %437 = vst [vmem:[#allocation1] ss:$4 sm:$0xff] %v435
          %v438 = vld.sshfl [vmem:[#allocation1] sm:$0xff pattern:$0x73625140]
          %v439 = vld.sshfl [vmem:[#allocation1 + $0x8] sm:$0xff pattern:$0x73625140]
          %v442 = vsel %vm387, %v438, 0.0
          %v443 = vsel %vm387, %v439, 0.0
          %v444 = vadd.f32 %v442, %v443
          %445 = vadd.xlane.f32.xlu0 %v444
          %v446 = vpop.xlane.xlu0 %445
          %v447 = vrot.slane %v446, 4
          %v448 = vadd.f32 %v446, %v447
          %v449 = vrot.slane %v448, 2
          %v450 = vadd.f32 %v448, %v449
          %v451 = vrot.slane %v450, 1
          %v452 = vadd.f32 %v450, %v451
          %s453 = vtos %v452
          %s454 = smul.f32 %s453, 0.00016276042
          %s455 = sld [smem:[#allocation4]]
          %s456 = smul.f32 %s455, 0.0078125
          %s457 = smul.f32 %s454, 10.0
          %s458 = sadd.f32 %s456, %s457
          %s459 = smul.f32 %s434, 10.0
          %s460 = sadd.f32 %s458, %s459
          %s461 = scalar_lea.smem [#allocation7], 0
          %462 = sst [smem:[%s461]] %s460
          %s463 = scalar_lea.smem [#allocation7], 1
          %464 = sst [smem:[%s463]] %s456
          %s465 = scalar_lea.smem [#allocation7], 2
          %466 = sst [smem:[%s465]] %s454
          %s467 = scalar_lea.smem [#allocation7], 3
          %468 = sst [smem:[%s467]] %s434
        $region120: #{cam_guided_loss.1} parent=103 // pred_fallthru
          _
        // Predicated region
        $region121: #{cam_guided_loss.1} parent=103 // pred_check
          %p469 = pneg %p128
        $region122: #{cam_guided_loss.1} parent=103 // pred_check_branch
          %471 = sbr.rel (%p469) target = $region124
        $region123: #{cam_guided_loss.1} parent=103 // pred_region
          %473 = vsyncadd [#allocation8], 0
          %s475 = sshll.u32 %s4, 4
          %s476 = int_to_ptr.vmem [resolvable:$true] %s475
          %478 = dma.smem_to_vmem [#allocation7], 16, %s476, [#allocation8]
        $region124: #{cam_guided_loss.1} parent=103 // pred_fallthru
          _
        // Predicated region
        $region125: #{cam_guided_loss.1} parent=103 // pred_check
          %p479 = pneg %p128
        $region126: #{cam_guided_loss.1} parent=103 // pred_check_branch
          %481 = sbr.rel (%p479) target = $region128
        $region127: #{cam_guided_loss.1} parent=103 // pred_region
          %483 = dma.done [#allocation8], 16
        $region128: #{cam_guided_loss.1} parent=103 // pred_fallthru
          _
        %484 = sfence
      $region104: #{cam_guided_loss.1} parent=5 // pred_fallthru
        _
      %p485 = scmp.le.s32.totalorder 2, %s11
      // Predicated region
      $region129: #{cam_guided_loss.1} parent=5 // pred_check
        %p486 = pneg %p485
      $region130: #{cam_guided_loss.1} parent=5 // pred_check_branch
        %488 = sbr.rel (%p486) target = $region132
      $region131: #{cam_guided_loss.1} parent=5 // pred_region
        %s489 = ssub.s32 %s11, 2
      $region132: #{cam_guided_loss.1} parent=5 // pred_fallthru
        _
    $region6: #{cam_guided_loss.1} parent=1 // loop_footer
      %s15 = sadd.s32 1, %s11
    $region7: #{cam_guided_loss.1} parent=1 // loop_footer_branch
      %10 = sbr.rel target = $region3
    $region8: #{cam_guided_loss.1} parent=1 // loop_exit
      _
    %490 = vsyncpa [#allocation8], 1
    %s491 = scalar_lea.sflag [#allocation8], 1
    %492 = vsyncpa %s491, 1

</llo_original>
